<compile_context>
chip_gen: v5e
topology: v5e:2x2
jax: 0.10.0
libtpu: 0.0.40
codegen_flags: <defaults>
</compile_context>

<pallas_src>
import jax
import jax.numpy as jnp
import numpy as np
from jax.experimental import pallas as pl
from jax.experimental.pallas import tpu as pltpu


def make_decoder_kernel(n_hidden_layers):
    """Kernel for a Decoder with `n_hidden_layers` extra hidden Linears.

    Transposed ("batch-on-lanes") ref layout:
      xT (x_dim, TM), wxT (h0, x_dim), b_eff (h0, 1),
      [wT_i (h_{i+1}, h_i), b_i (h_{i+1}, 1)] * n_hidden_layers,
      w_outT (y_dim, h_last), b_out (y_dim, 1), outT (y_dim, TM)
    All f32; MXU accumulates in f32.
    """

    def kernel(*refs):
        xt_ref, wx_ref, b_eff_ref = refs[:3]
        hidden_refs = refs[3:3 + 2 * n_hidden_layers]
        w_out_ref = refs[3 + 2 * n_hidden_layers]
        b_out_ref = refs[4 + 2 * n_hidden_layers]
        out_ref = refs[-1]

        # First layer: h^T = relu(Wx^T @ x^T + b_eff),
        # with b_eff = (z @ W_in_z + b_in)^T folded once in the wrapper.
        h = jnp.dot(wx_ref[...], xt_ref[...], preferred_element_type=jnp.float32)
        h = jnp.maximum(h + b_eff_ref[...], 0.0)     # (h0, TM), lane-dense
        # Dropout: identity at inference (training=False).

        # Hidden layers (static Python unroll -- layer count is compile-time).
        for i in range(n_hidden_layers):
            w = hidden_refs[2 * i][...]
            b = hidden_refs[2 * i + 1][...]
            h = jnp.maximum(
                jnp.dot(w, h, preferred_element_type=jnp.float32) + b, 0.0
            )

        # Output layer (no activation): (y_dim, TM), lane-dense unmasked stores.
        out_ref[...] = (
            jnp.dot(w_out_ref[...], h, preferred_element_type=jnp.float32)
            + b_out_ref[...]
        )

    return kernel


def _round_up(a, b):
    return ((a + b - 1) // b) * b


def decoder_forward(z, x, params, y_dim, tile_m=2048):
    """params: dict with keys w_in_z, w_in_x, b_in, hidden (list of (w, b)), w_out, b_out."""
    n_hidden_layers = len(params["hidden"])
    n, x_dim = x.shape
    f32 = jnp.float32

    # Exact fold of the z-projection into one effective bias (tiny one-time op).
    b_eff = (
        z.astype(f32) @ params["w_in_z"].astype(f32) + params["b_in"].astype(f32)
    ).T                                               # (h0, 1)

    # Transposed weights (trace-time, tiny, VMEM-resident in the kernel).
    wxT = params["w_in_x"].astype(f32).T              # (h0, x_dim)
    hidden = [
        (w.astype(f32).T, b.astype(f32).T) for (w, b) in params["hidden"]
    ]                                                 # (h_out, h_in), (h_out, 1)
    w_outT = params["w_out"].astype(f32).T            # (y_dim, h_last)
    b_outT = params["b_out"].astype(f32).T            # (y_dim, 1)

    # Batch tile = lane dim: multiple of 128, capped at tile_m; prefer >= 2 grid
    # steps when N allows so v7x's two TensorCores both get a share.
    tm = max(128, min(_round_up(tile_m, 128), _round_up(n, 128)))
    if _round_up(n, tm) // tm < 2 and n > 128:
        tm = max(128, _round_up(_round_up(n, 128) // 2, 128))
    n_pad = _round_up(n, tm)
    grid = (n_pad // tm,)

    # Batch-on-lanes: stream x^T. No dtype cast (f32 throughout); pad only the
    # (rare) ragged remainder -- padded columns are zeros and are sliced off.
    xT = x.astype(f32).T                              # (x_dim, n)
    if n_pad != n:
        xT = jnp.pad(xT, ((0, 0), (0, n_pad - n)))

    inputs = [xT, wxT, b_eff]
    in_specs = [
        pl.BlockSpec((x_dim, tm), lambda i: (0, i)),  # streamed, lane-dense
        pl.BlockSpec(wxT.shape, lambda i: (0, 0)),    # VMEM-resident weights
        pl.BlockSpec(b_eff.shape, lambda i: (0, 0)),
    ]
    for (w, b) in hidden:
        inputs += [w, b]
        in_specs += [
            pl.BlockSpec(w.shape, lambda i: (0, 0)),
            pl.BlockSpec(b.shape, lambda i: (0, 0)),
        ]
    inputs += [w_outT, b_outT]
    in_specs += [
        pl.BlockSpec(w_outT.shape, lambda i: (0, 0)),
        pl.BlockSpec(b_outT.shape, lambda i: (0, 0)),
    ]

    out_t = pl.pallas_call(
        make_decoder_kernel(n_hidden_layers),
        out_shape=jax.ShapeDtypeStruct((y_dim, n_pad), f32),
        grid=grid,
        in_specs=in_specs,
        # out^T tile (y_dim, TM): lane-dense, unmasked full-width stores.
        out_specs=pl.BlockSpec((y_dim, tm), lambda i: (0, i)),
        compiler_params=pltpu.CompilerParams(
            dimension_semantics=("parallel",),        # batch axis shards over TCs
            vmem_limit_bytes=32 * 1024 * 1024,        # << physical on v5e/v6e/v7x
        ),
    )(*inputs)

    # Back to the module's (N, y_dim) orientation (tiny fused slice+transpose).
    return out_t[:, :n].T


def init_params(key, repr_dim, x_dim, y_dim, hidden_dims):
    """Deterministic synthetic parameters (shapes match the PyTorch module)."""
    keys = jax.random.split(key, 2 * (len(hidden_dims) + 1) + 1)
    ki = iter(keys)

    def lin(k, fan_in, fan_out):
        kw, kb = jax.random.split(k)
        scale = 1.0 / np.sqrt(fan_in)
        w = jax.random.uniform(kw, (fan_in, fan_out), jnp.float32, -scale, scale)
        b = jax.random.uniform(kb, (1, fan_out), jnp.float32, -scale, scale)
        return w, b

    in_dim = repr_dim + x_dim
    w_in, b_in = lin(next(ki), in_dim, hidden_dims[0])
    params = {
        "w_in_z": w_in[:repr_dim, :],   # (repr_dim, hidden[0])
        "w_in_x": w_in[repr_dim:, :],   # (x_dim,    hidden[0])
        "b_in": b_in,                   # (1, hidden[0])
        "hidden": [],
    }
    for i in range(len(hidden_dims) - 1):
        params["hidden"].append(lin(next(ki), hidden_dims[i], hidden_dims[i + 1]))
    params["w_out"], params["b_out"] = lin(next(ki), hidden_dims[-1], y_dim)
    return params


def reference_forward(z, x, params):
    """Pure-JAX f32 reference (mirrors the PyTorch forward in eval mode)."""
    n = x.shape[0]
    z_rep = jnp.broadcast_to(z, (n, z.shape[1]))
    h = jnp.concatenate([z_rep, x], axis=1)
    w_in = jnp.concatenate([params["w_in_z"], params["w_in_x"]], axis=0)
    h = jax.nn.relu(h @ w_in + params["b_in"])
    for (w, b) in params["hidden"]:
        h = jax.nn.relu(h @ w + b)
    return h @ params["w_out"] + params["b_out"]


if __name__ == "__main__":
    repr_dim, x_dim, y_dim = 16, 8, 4
    hidden_dims = [32, 32]

    key = jax.random.PRNGKey(0)
    kz, kx, kp, kx2 = jax.random.split(key, 4)
    params = init_params(kp, repr_dim, x_dim, y_dim, hidden_dims)
    z = jax.random.normal(kz, (1, repr_dim), jnp.float32)

    # Small-batch test (single tile, padded up to one 128-lane tile).
    n = 8
    x = jax.random.normal(kx, (n, x_dim), jnp.float32)
    out = jax.block_until_ready(decoder_forward(z, x, params, y_dim))
    ref = reference_forward(z, x, params)
    np.testing.assert_allclose(np.asarray(out), np.asarray(ref), rtol=1e-2, atol=1e-2)

    # Multi-tile test: exercises the batch grid (>= 2 steps) + ragged padding.
    n2 = 300
    x2 = jax.random.normal(kx2, (n2, x_dim), jnp.float32)
    out2 = jax.block_until_ready(decoder_forward(z, x2, params, y_dim, tile_m=2048))
    ref2 = reference_forward(z, x2, params)
    np.testing.assert_allclose(np.asarray(out2), np.asarray(ref2), rtol=1e-2, atol=1e-2)

    print("KERNEL_OK")
</pallas_src>

<mosaic_0001>
module attributes {stable_mosaic.version = 11 : i64} {
  func.func @kernel(%arg0: i32, %arg1: memref<8x128xf32, #tpu.memory_space<vmem>>, %arg2: memref<32x8xf32, #tpu.memory_space<vmem>>, %arg3: memref<32x1xf32, #tpu.memory_space<vmem>>, %arg4: memref<32x32xf32, #tpu.memory_space<vmem>>, %arg5: memref<32x1xf32, #tpu.memory_space<vmem>>, %arg6: memref<4x32xf32, #tpu.memory_space<vmem>>, %arg7: memref<4x1xf32, #tpu.memory_space<vmem>>, %arg8: memref<4x128xf32, #tpu.memory_space<vmem>>) attributes {dimension_semantics = [#tpu.dimension_semantics<parallel>], iteration_bounds = array<i64: 1>, scalar_prefetch = 0 : i64, scratch_operands = 0 : i64, tpu.core_type = #tpu.core_type<tc>, window_params = [{transform_indices = @transform_0, window_bounds = array<i64: 8, 128>}, {pipeline_mode = #tpu.pipeline_mode<synchronous>, transform_indices = @transform_1, window_bounds = array<i64: 32, 8>}, {pipeline_mode = #tpu.pipeline_mode<synchronous>, transform_indices = @transform_2, window_bounds = array<i64: 32, 1>}, {pipeline_mode = #tpu.pipeline_mode<synchronous>, transform_indices = @transform_3, window_bounds = array<i64: 32, 32>}, {pipeline_mode = #tpu.pipeline_mode<synchronous>, transform_indices = @transform_4, window_bounds = array<i64: 32, 1>}, {pipeline_mode = #tpu.pipeline_mode<synchronous>, transform_indices = @transform_5, window_bounds = array<i64: 4, 32>}, {pipeline_mode = #tpu.pipeline_mode<synchronous>, transform_indices = @transform_6, window_bounds = array<i64: 4, 1>}, {transform_indices = @transform_7, window_bounds = array<i64: 4, 128>}]} {
    %c0 = arith.constant 0 : index
    %c0_0 = arith.constant 0 : index
    %0 = vector.load %arg2[%c0, %c0_0] : memref<32x8xf32, #tpu.memory_space<vmem>>, vector<32x8xf32>
    %c0_1 = arith.constant 0 : index
    %c0_2 = arith.constant 0 : index
    %1 = vector.load %arg1[%c0_1, %c0_2] : memref<8x128xf32, #tpu.memory_space<vmem>>, vector<8x128xf32>
    %cst = arith.constant dense<0.000000e+00> : vector<32x128xf32>
    %2 = tpu.matmul %0, %1, %cst {dimension_numbers = #tpu.dot_dimension_numbers<[1], [0], [0], [1], [0, 0, 1, 1], [], []>} : vector<32x8xf32>, vector<8x128xf32>, vector<32x128xf32> -> vector<32x128xf32>
    %c0_3 = arith.constant 0 : index
    %c0_4 = arith.constant 0 : index
    %3 = vector.load %arg3[%c0_3, %c0_4] : memref<32x1xf32, #tpu.memory_space<vmem>>, vector<32x1xf32>
    %4 = vector.broadcast %3 : vector<32x1xf32> to vector<32x128xf32>
    %5 = arith.addf %2, %4 : vector<32x128xf32>
    %cst_5 = arith.constant 0.000000e+00 : f32
    %6 = vector.broadcast %cst_5 : f32 to vector<32x128xf32>
    %7 = arith.maximumf %5, %6 : vector<32x128xf32>
    %c0_6 = arith.constant 0 : index
    %c0_7 = arith.constant 0 : index
    %8 = vector.load %arg4[%c0_6, %c0_7] : memref<32x32xf32, #tpu.memory_space<vmem>>, vector<32x32xf32>
    %c0_8 = arith.constant 0 : index
    %c0_9 = arith.constant 0 : index
    %9 = vector.load %arg5[%c0_8, %c0_9] : memref<32x1xf32, #tpu.memory_space<vmem>>, vector<32x1xf32>
    %cst_10 = arith.constant dense<0.000000e+00> : vector<32x128xf32>
    %10 = tpu.matmul %8, %7, %cst_10 {dimension_numbers = #tpu.dot_dimension_numbers<[1], [0], [0], [1], [0, 0, 1, 1], [], []>} : vector<32x32xf32>, vector<32x128xf32>, vector<32x128xf32> -> vector<32x128xf32>
    %11 = vector.broadcast %9 : vector<32x1xf32> to vector<32x128xf32>
    %12 = arith.addf %10, %11 : vector<32x128xf32>
    %cst_11 = arith.constant 0.000000e+00 : f32
    %13 = vector.broadcast %cst_11 : f32 to vector<32x128xf32>
    %14 = arith.maximumf %12, %13 : vector<32x128xf32>
    %c0_12 = arith.constant 0 : index
    %c0_13 = arith.constant 0 : index
    %15 = vector.load %arg6[%c0_12, %c0_13] : memref<4x32xf32, #tpu.memory_space<vmem>>, vector<4x32xf32>
    %cst_14 = arith.constant dense<0.000000e+00> : vector<4x128xf32>
    %16 = tpu.matmul %15, %14, %cst_14 {dimension_numbers = #tpu.dot_dimension_numbers<[1], [0], [0], [1], [0, 0, 1, 1], [], []>} : vector<4x32xf32>, vector<32x128xf32>, vector<4x128xf32> -> vector<4x128xf32>
    %c0_15 = arith.constant 0 : index
    %c0_16 = arith.constant 0 : index
    %17 = vector.load %arg7[%c0_15, %c0_16] : memref<4x1xf32, #tpu.memory_space<vmem>>, vector<4x1xf32>
    %18 = vector.broadcast %17 : vector<4x1xf32> to vector<4x128xf32>
    %19 = arith.addf %16, %18 : vector<4x128xf32>
    %c0_17 = arith.constant 0 : index
    %c0_18 = arith.constant 0 : index
    %20 = vector.load %arg8[%c0_17, %c0_18] : memref<4x128xf32, #tpu.memory_space<vmem>>, vector<4x128xf32>
    tpu.vector_store %arg8[%c0_17, %c0_18], %19 {strides = array<i32>} : memref<4x128xf32, #tpu.memory_space<vmem>>, vector<4x128xf32>,
    return
  }
  func.func @transform_0(%arg0: i32) -> (i32, i32) {
    %c0_i32 = arith.constant 0 : i32
    %c0_i32_0 = arith.constant 0 : i32
    return %c0_i32, %arg0 : i32, i32
  }
  func.func @transform_1(%arg0: i32) -> (i32, i32) {
    %c0_i32 = arith.constant 0 : i32
    %c0_i32_0 = arith.constant 0 : i32
    %c0_i32_1 = arith.constant 0 : i32
    return %c0_i32, %c0_i32_0 : i32, i32
  }
  func.func @transform_2(%arg0: i32) -> (i32, i32) {
    %c0_i32 = arith.constant 0 : i32
    %c0_i32_0 = arith.constant 0 : i32
    %c0_i32_1 = arith.constant 0 : i32
    return %c0_i32, %c0_i32_0 : i32, i32
  }
  func.func @transform_3(%arg0: i32) -> (i32, i32) {
    %c0_i32 = arith.constant 0 : i32
    %c0_i32_0 = arith.constant 0 : i32
    %c0_i32_1 = arith.constant 0 : i32
    return %c0_i32, %c0_i32_0 : i32, i32
  }
  func.func @transform_4(%arg0: i32) -> (i32, i32) {
    %c0_i32 = arith.constant 0 : i32
    %c0_i32_0 = arith.constant 0 : i32
    %c0_i32_1 = arith.constant 0 : i32
    return %c0_i32, %c0_i32_0 : i32, i32
  }
  func.func @transform_5(%arg0: i32) -> (i32, i32) {
    %c0_i32 = arith.constant 0 : i32
    %c0_i32_0 = arith.constant 0 : i32
    %c0_i32_1 = arith.constant 0 : i32
    return %c0_i32, %c0_i32_0 : i32, i32
  }
  func.func @transform_6(%arg0: i32) -> (i32, i32) {
    %c0_i32 = arith.constant 0 : i32
    %c0_i32_0 = arith.constant 0 : i32
    %c0_i32_1 = arith.constant 0 : i32
    return %c0_i32, %c0_i32_0 : i32, i32
  }
  func.func @transform_7(%arg0: i32) -> (i32, i32) {
    %c0_i32 = arith.constant 0 : i32
    %c0_i32_0 = arith.constant 0 : i32
    return %c0_i32, %arg0 : i32, i32
  }
}

</mosaic_0001>

<llo_original>
// kernel: tpu_custom_call.1
$region0: #{tpu_custom_call.1}
  #allocation0 [shape = 'u32[]', space=smem, size = 0x4, offset = 0x4, fixed_abs, tag = 'smem constant byte address 0x4 - core index']
  #allocation1 [shape = 'u32[72,128]{1,0:T(1,128)}', space=vmem, size = 0x9000, scoped, tag = 'internal scratch']
  %s0 = inlined_call_operand.vmem [shape: f32[8,128], index: 0, kind: input, shape index: {}]
  %s1 = inlined_call_operand.vmem [shape: f32[32,8], index: 1, kind: input, shape index: {}]
  %s2 = inlined_call_operand.vmem [shape: f32[32,1], index: 2, kind: input, shape index: {}]
  %s3 = inlined_call_operand.vmem [shape: f32[32,32], index: 3, kind: input, shape index: {}]
  %s4 = inlined_call_operand.vmem [shape: f32[32,1], index: 4, kind: input, shape index: {}]
  %s5 = inlined_call_operand.vmem [shape: f32[4,32], index: 5, kind: input, shape index: {}]
  %s6 = inlined_call_operand.vmem [shape: f32[4,1], index: 6, kind: input, shape index: {}]
  %s7 = inlined_call_operand.hbm [shape: f32[4,128], index: 7, kind: output, shape index: {}]
  %s8 = sld [smem:[#allocation0]]
  $region38: #{tpu_custom_call.1} parent=0
    _
  %s10 = ssub.s32 1, %s8
  %s11 = scalar_select 0, %s10, %s8
  $region1: #{tpu_custom_call.1} parent=0
    #allocation2 [shape = 'u8[2048]{0}', space=vmem, size = 0x800, scoped, tag = 'output window, operand 0, single buffered']
    #allocation3 [shape = 's32[1]{0}', space=sflag, size = 0x4, scoped, tag = 'scoped memory for tpu_custom_call.1']
    %12 = vsyncpa [#allocation3], 0
    // Predicated region
    $region2: #{tpu_custom_call.1} parent=1 // pred_check
      _
    $region3: #{tpu_custom_call.1} parent=1 // pred_check_branch
      %14 = sbr.rel (0) target = $region5
    $region4: #{tpu_custom_call.1} parent=1 // pred_region
      _
    $region5: #{tpu_custom_call.1} parent=1 // pred_fallthru
      _
    // Predicated region
    $region6: #{tpu_custom_call.1} parent=1 // pred_check
      _
    $region7: #{tpu_custom_call.1} parent=1 // pred_check_branch
      %16 = sbr.rel (0) target = $region9
    $region8: #{tpu_custom_call.1} parent=1 // pred_region
      _
    $region9: #{tpu_custom_call.1} parent=1 // pred_fallthru
      _
    // Predicated region
    $region10: #{tpu_custom_call.1} parent=1 // pred_check
      _
    $region11: #{tpu_custom_call.1} parent=1 // pred_check_branch
      %18 = sbr.rel (0) target = $region13
    $region12: #{tpu_custom_call.1} parent=1 // pred_region
      _
    $region13: #{tpu_custom_call.1} parent=1 // pred_fallthru
      _
    // Predicated region
    $region14: #{tpu_custom_call.1} parent=1 // pred_check
      _
    $region15: #{tpu_custom_call.1} parent=1 // pred_check_branch
      %20 = sbr.rel (0) target = $region17
    $region16: #{tpu_custom_call.1} parent=1 // pred_region
      _
    $region17: #{tpu_custom_call.1} parent=1 // pred_fallthru
      _
    // Predicated region
    $region18: #{tpu_custom_call.1} parent=1 // pred_check
      _
    $region19: #{tpu_custom_call.1} parent=1 // pred_check_branch
      %22 = sbr.rel (0) target = $region21
    $region20: #{tpu_custom_call.1} parent=1 // pred_region
      _
    $region21: #{tpu_custom_call.1} parent=1 // pred_fallthru
      _
    // Predicated region
    $region22: #{tpu_custom_call.1} parent=1 // pred_check
      _
    $region23: #{tpu_custom_call.1} parent=1 // pred_check_branch
      %24 = sbr.rel (0) target = $region25
    $region24: #{tpu_custom_call.1} parent=1 // pred_region
      _
    $region25: #{tpu_custom_call.1} parent=1 // pred_fallthru
      _
    // Predicated region
    $region26: #{tpu_custom_call.1} parent=1 // pred_check
      _
    $region27: #{tpu_custom_call.1} parent=1 // pred_check_branch
      %26 = sbr.rel (0) target = $region29
    $region28: #{tpu_custom_call.1} parent=1 // pred_region
      _
    $region29: #{tpu_custom_call.1} parent=1 // pred_fallthru
      _
    %v27 = vld [vmem:[%s1] sm:$0xff]
    %v28 = vld [vmem:[%s1 + $0x8] sm:$0xff]
    %v29 = vld [vmem:[%s1 + $0x10] sm:$0xff]
    %v30 = vld [vmem:[%s1 + $0x18] sm:$0xff]
    %v31 = vld [vmem:[%s0] sm:$0xff]
    %v32 = vld [vmem:[%s2] sm:$0xff]
    %v33 = vld [vmem:[%s2 + $0x8] sm:$0xff]
    %v34 = vld [vmem:[%s2 + $0x10] sm:$0xff]
    %v35 = vld [vmem:[%s2 + $0x18] sm:$0xff]
    %37 = vset.pattern.permute.xlu0 0
    %38 = vperm.xlu0 %37, %v32
    %v39 = vpop.permute.xlu0 %38
    %42 = vset.pattern.permute.xlu0 0
    %43 = vperm.xlu0 %42, %v33
    %v44 = vpop.permute.xlu0 %43
    %47 = vset.pattern.permute.xlu0 0
    %48 = vperm.xlu0 %47, %v34
    %v49 = vpop.permute.xlu0 %48
    %52 = vset.pattern.permute.xlu0 0
    %53 = vperm.xlu0 %52, %v35
    %v54 = vpop.permute.xlu0 %53
    %vm56 = vcmask 64512
    %v58 = vsel %vm56, %v27, 0
    %v61 = vsel %vm56, %v28, 0
    %v64 = vsel %vm56, %v29, 0
    %v67 = vsel %vm56, %v30, 0
    %69 = vmatpush.msra.mxu0 0.0
    %70 = vmatpush.msra.mxu0 0.0
    %71 = vmatpush.msra.mxu0 0.0
    %72 = vmatpush.msra.mxu0 0.0
    %73 = vmatpush.msra.mxu0 0.0
    %74 = vmatpush.msra.mxu0 0.0
    %75 = vmatpush.msra.mxu0 0.0
    %76 = vmatpush.msra.mxu0 0.0
    %77 = vmatpush.msra.mxu0 0.0
    %78 = vmatpush.msra.mxu0 0.0
    %79 = vmatpush.msra.mxu0 0.0
    %80 = vmatpush.msra.mxu0 0.0
    %81 = vmatpush.msra.mxu0 0.0
    %82 = vmatpush.msra.mxu0 0.0
    %83 = vmatpush.msra.mxu0 0.0
    %84 = vmatpush.msra.mxu0 %v31
    %85 = vmatmul.f32.gmra.mxu0 %v58
    %v86 = vpop.f32.mrf.mxu0
    %v87 = vadd.f32 %v39, %v86
    %88 = vmatmul.f32.gmra.mxu0 %v61
    %v89 = vpop.f32.mrf.mxu0
    %v90 = vadd.f32 %v44, %v89
    %91 = vmatmul.f32.gmra.mxu0 %v64
    %v92 = vpop.f32.mrf.mxu0
    %v93 = vadd.f32 %v49, %v92
    %94 = vmatmul.f32.gmra.mxu0 %v67
    %v95 = vpop.f32.mrf.mxu0
    %v96 = vadd.f32 %v54, %v95
    %97 = vdwg.mxu0
    %v98 = vmax.f32 %v87, 0.0
    %v99 = vmax.f32 %v90, 0.0
    %v100 = vmax.f32 %v93, 0.0
    %v101 = vmax.f32 %v96, 0.0
    %v102 = vld [vmem:[%s3] sm:$0xff]
    %v103 = vld [vmem:[%s3 + $0x8] sm:$0xff]
    %v104 = vld [vmem:[%s3 + $0x10] sm:$0xff]
    %v105 = vld [vmem:[%s3 + $0x18] sm:$0xff]
    %v106 = vld [vmem:[%s4] sm:$0xff]
    %v107 = vld [vmem:[%s4 + $0x8] sm:$0xff]
    %v108 = vld [vmem:[%s4 + $0x10] sm:$0xff]
    %v109 = vld [vmem:[%s4 + $0x18] sm:$0xff]
    %111 = vset.pattern.permute.xlu0 0
    %112 = vperm.xlu0 %111, %v106
    %v113 = vpop.permute.xlu0 %112
    %116 = vset.pattern.permute.xlu0 0
    %117 = vperm.xlu0 %116, %v107
    %v118 = vpop.permute.xlu0 %117
    %121 = vset.pattern.permute.xlu0 0
    %122 = vperm.xlu0 %121, %v108
    %v123 = vpop.permute.xlu0 %122
    %126 = vset.pattern.permute.xlu0 0
    %127 = vperm.xlu0 %126, %v109
    %v128 = vpop.permute.xlu0 %127
    %vm130 = vcmask 261120
    %v132 = vsel %vm130, %v102, 0
    %v135 = vsel %vm130, %v103, 0
    %v138 = vsel %vm130, %v104, 0
    %v141 = vsel %vm130, %v105, 0
    %143 = vmatpush.msra.mxu0 0.0
    %144 = vmatpush.msra.mxu0 0.0
    %145 = vmatpush.msra.mxu0 0.0
    %146 = vmatpush.msra.mxu0 0.0
    %147 = vmatpush.msra.mxu0 0.0
    %148 = vmatpush.msra.mxu0 0.0
    %149 = vmatpush.msra.mxu0 0.0
    %150 = vmatpush.msra.mxu0 0.0
    %151 = vmatpush.msra.mxu0 0.0
    %152 = vmatpush.msra.mxu0 0.0
    %153 = vmatpush.msra.mxu0 0.0
    %154 = vmatpush.msra.mxu0 0.0
    %155 = vmatpush.msra.mxu0 %v101
    %156 = vmatpush.msra.mxu0 %v100
    %157 = vmatpush.msra.mxu0 %v99
    %158 = vmatpush.msra.mxu0 %v98
    %159 = vmatmul.f32.gmra.mxu0 %v132
    %v160 = vpop.f32.mrf.mxu0
    %v161 = vadd.f32 %v113, %v160
    %162 = vmatmul.f32.gmra.mxu0 %v135
    %v163 = vpop.f32.mrf.mxu0
    %v164 = vadd.f32 %v118, %v163
    %165 = vmatmul.f32.gmra.mxu0 %v138
    %v166 = vpop.f32.mrf.mxu0
    %v167 = vadd.f32 %v123, %v166
    %168 = vmatmul.f32.gmra.mxu0 %v141
    %v169 = vpop.f32.mrf.mxu0
    %v170 = vadd.f32 %v128, %v169
    %171 = vdwg.mxu0
    %v172 = vmax.f32 %v161, 0.0
    %v173 = vmax.f32 %v164, 0.0
    %v174 = vmax.f32 %v167, 0.0
    %v175 = vmax.f32 %v170, 0.0
    %v176 = vld [vmem:[%s5] sm:$0xf]
    %v177 = vld [vmem:[%s6] sm:$0xf]
    %179 = vset.pattern.permute.xlu0 0
    %180 = vperm.xlu0 %179, %v177
    %v181 = vpop.permute.xlu0 %180
    %v184 = vsel %vm130, %v176, 0
    %186 = vmatpush.msra.mxu0 0.0
    %187 = vmatpush.msra.mxu0 0.0
    %188 = vmatpush.msra.mxu0 0.0
    %189 = vmatpush.msra.mxu0 0.0
    %190 = vmatpush.msra.mxu0 0.0
    %191 = vmatpush.msra.mxu0 0.0
    %192 = vmatpush.msra.mxu0 0.0
    %193 = vmatpush.msra.mxu0 0.0
    %194 = vmatpush.msra.mxu0 0.0
    %195 = vmatpush.msra.mxu0 0.0
    %196 = vmatpush.msra.mxu0 0.0
    %197 = vmatpush.msra.mxu0 0.0
    %198 = vmatpush.msra.mxu0 %v175
    %199 = vmatpush.msra.mxu0 %v174
    %200 = vmatpush.msra.mxu0 %v173
    %201 = vmatpush.msra.mxu0 %v172
    %202 = vmatmul.f32.gmra.mxu0 %v184
    %v203 = vpop.f32.mrf.mxu0
    %v204 = vadd.f32 %v181, %v203
    %205 = vdwg.mxu0
    %206 = vst [vmem:[#allocation2] sm:$0xf] %v204
    // Predicated region
    $region30: #{tpu_custom_call.1} parent=1 // pred_check
      _
    $region31: #{tpu_custom_call.1} parent=1 // pred_check_branch
      %208 = sbr.rel (0) target = $region33
    $region32: #{tpu_custom_call.1} parent=1 // pred_region
      %210 = vsyncadd [#allocation3], 0
      %s212 = sshll.u32 [#allocation2], 4
      %s213 = int_to_ptr.vmem [resolvable:$true] %s212
      %s214 = sshll.u32 %s7, 4
      %s215 = int_to_ptr.hbm [resolvable:$true] %s214
      %217 = dma.vmem_to_hbm [thread:$0]  %s213, 64, %s215, [#allocation3]
    $region33: #{tpu_custom_call.1} parent=1 // pred_fallthru
      _
    // Predicated region
    $region34: #{tpu_custom_call.1} parent=1 // pred_check
      _
    $region35: #{tpu_custom_call.1} parent=1 // pred_check_branch
      %219 = sbr.rel (0) target = $region37
    $region36: #{tpu_custom_call.1} parent=1 // pred_region
      %221 = dma.done [#allocation3], 64
    $region37: #{tpu_custom_call.1} parent=1 // pred_fallthru
      _
    %222 = vsyncpa [#allocation3], 1

</llo_original>
